<compile_context>
chip_gen: v5e
topology: v5e:2x2
jax: 0.10.0
libtpu: 0.0.40
codegen_flags: <defaults>
</compile_context>

<pallas_src>
import functools

import jax
import jax.numpy as jnp
from jax.experimental import pallas as pl
from jax.experimental.pallas import tpu as pltpu

LANE = 128  # pad class axis up to a lane-dense multiple of 128


# ----------------------------------------------------------------------------
# Fused kernel: linear forward + softmax + per-example cross-entropy
# ----------------------------------------------------------------------------
def _fused_kernel(x_ref, w_ref, b_ref, lab_ref,
                  logits_ref, probs_ref, loss_ref,
                  *, n_classes):
    # ---- forward: logits = x @ W + b (bf16 inputs, MXU f32 accumulate) ----
    logits = jnp.dot(x_ref[...], w_ref[...],
                     preferred_element_type=jnp.float32) + b_ref[...]
    logits_ref[...] = logits                               # padded cols sliced off outside

    # ---- softmax over class axis (padded columns masked to -inf), all f32 ----
    col = jax.lax.broadcasted_iota(jnp.int32, logits.shape, 1)
    masked = jnp.where(col < n_classes, logits, -jnp.inf)
    m = jnp.max(masked, axis=1, keepdims=True)             # [tile_n, 1]
    e = jnp.exp(masked - m)                                # padded cols -> 0
    denom = jnp.sum(e, axis=1, keepdims=True)              # [tile_n, 1]
    # approx reciprocal -> EUP slot; row sums off by ~1e-3 (documented above)
    probs_ref[...] = (e * pl.reciprocal(denom, approx=True)).astype(probs_ref.dtype)

    # ---- per-example cross entropy: logsumexp - logit[label] (reuse m, denom) ----
    labels = lab_ref[...]                                  # [tile_n, 1] int32
    lse = m + jnp.log(denom)
    picked = jnp.sum(jnp.where(col == labels, logits, 0.0), axis=1, keepdims=True)
    loss_ref[...] = lse - picked                           # [tile_n, 1] f32


def fused_forward_predict_loss(x, w, b, labels, *, tile_n=512):
    """Returns (logits [N,C] f32, probs [N,C] bf16, loss scalar f32)."""
    n, f = x.shape
    c = w.shape[1]
    c_pad = ((c + LANE - 1) // LANE) * LANE

    # Single grid step when the whole batch fits one tile (common small-N case).
    if n <= tile_n:
        tile_n = n
    n_pad = ((n + tile_n - 1) // tile_n) * tile_n
    num_tiles = n_pad // tile_n

    # bf16 x/W halve the input DMA bytes; MXU consumed bf16 already, numerics unchanged.
    w_p = jnp.pad(w, ((0, 0), (0, c_pad - c))).astype(jnp.bfloat16)
    b_p = jnp.pad(jnp.reshape(b, (1, c)), ((0, 0), (0, c_pad - c)))      # f32
    x_p = x.astype(jnp.bfloat16)
    lab_p = labels.astype(jnp.int32)
    if n_pad != n:  # only pay the pad copy when the batch doesn't tile evenly
        x_p = jnp.pad(x_p, ((0, n_pad - n), (0, 0)))
        lab_p = jnp.pad(lab_p, (0, n_pad - n))
    lab_p = lab_p.reshape(n_pad, 1)

    kernel = functools.partial(_fused_kernel, n_classes=c)
    bytes_accessed = (2 * n_pad * f + 2 * f * c_pad + 4 * c_pad + 4 * n_pad
                      + 4 * n_pad * c_pad            # logits (f32)
                      + 2 * n_pad * c_pad            # probs  (bf16)
                      + 4 * n_pad)                   # per-example loss

    logits_p, probs_p, per_ex = pl.pallas_call(
        kernel,
        out_shape=(
            jax.ShapeDtypeStruct((n_pad, c_pad), jnp.float32),    # logits (padded)
            jax.ShapeDtypeStruct((n_pad, c_pad), jnp.bfloat16),   # probs  (padded)
            jax.ShapeDtypeStruct((n_pad, 1), jnp.float32),        # per-example CE
        ),
        grid=(num_tiles,),
        in_specs=[
            pl.BlockSpec((tile_n, f), lambda i: (i, 0)),          # x row tile (bf16)
            pl.BlockSpec((f, c_pad), lambda i: (0, 0)),           # W (resident, bf16)
            pl.BlockSpec((1, c_pad), lambda i: (0, 0)),           # b (resident, f32)
            pl.BlockSpec((tile_n, 1), lambda i: (i, 0)),          # labels row tile
        ],
        out_specs=(
            pl.BlockSpec((tile_n, c_pad), lambda i: (i, 0)),      # logits
            pl.BlockSpec((tile_n, c_pad), lambda i: (i, 0)),      # probs
            pl.BlockSpec((tile_n, 1), lambda i: (i, 0)),          # per-example loss
        ),
        # No cross-step reduction carried in the kernel anymore -> batch axis is
        # embarrassingly parallel (shards across the 2 TCs on v7x).
        compiler_params=pltpu.CompilerParams(
            dimension_semantics=("parallel",),
        ),
        cost_estimate=pl.CostEstimate(
            flops=2 * n_pad * f * c_pad,
            transcendentals=n_pad * (c_pad + 2),
            bytes_accessed=bytes_accessed,
        ),
    )(x_p, w_p, b_p, lab_p)

    loss = jnp.sum(per_ex[:n, 0]) / jnp.float32(n)   # mean over real rows only
    return logits_p[:n, :c], probs_p[:n, :c], loss


# ----------------------------------------------------------------------------
# Deterministic parameter init (mirrors nn.Linear default: U(-1/sqrt(F), +))
# ----------------------------------------------------------------------------
def init_params(key, in_features, out_features):
    kw, kb = jax.random.split(key)
    bound = 1.0 / jnp.sqrt(jnp.float32(in_features))
    w = jax.random.uniform(kw, (in_features, out_features), jnp.float32,
                           minval=-bound, maxval=bound)
    b = jax.random.uniform(kb, (1, out_features), jnp.float32,
                           minval=-bound, maxval=bound)
    return w, b


if __name__ == "__main__":
    key = jax.random.PRNGKey(0)
    k_x, k_p, k_y = jax.random.split(key, 3)

    N, F, C = 256, 32, 10            # batch, in_features, config.output_dim
    x = jax.random.normal(k_x, (N, F), jnp.float32)
    w, b = init_params(k_p, F, C)
    labels = jax.random.randint(k_y, (N,), 0, C, jnp.int32)

    # N <= tile_n -> single grid step for this demo shape.
    logits, probs, loss = fused_forward_predict_loss(x, w, b, labels, tile_n=512)
    jax.block_until_ready((logits, probs, loss))

    # pure-JAX reference along the same bf16-matmul path
    ref_logits = jnp.dot(x.astype(jnp.bfloat16), w.astype(jnp.bfloat16),
                         preferred_element_type=jnp.float32) + b
    ref_probs = jax.nn.softmax(ref_logits, axis=1)
    ref_lse = jax.scipy.special.logsumexp(ref_logits, axis=1)
    ref_loss = jnp.mean(ref_lse - ref_logits[jnp.arange(N), labels])

    assert logits.shape == (N, C) and probs.shape == (N, C)
    probs_f32 = probs.astype(jnp.float32)
    assert bool(jnp.all(jnp.abs(jnp.sum(probs_f32, axis=1) - 1.0) < 1e-2))
    assert bool(jnp.max(jnp.abs(logits - ref_logits)) < 1e-2)
    assert bool(jnp.max(jnp.abs(probs_f32 - ref_probs)) < 1e-2)
    assert bool(jnp.abs(loss - ref_loss) < 1e-2)
    assert bool(jnp.isfinite(loss))

    print("KERNEL_OK")
</pallas_src>

<mosaic_0001>
module attributes {stable_mosaic.version = 11 : i64} {
  func.func @_fused_kernel(%arg0: i32, %arg1: memref<256x32xbf16, #tpu.memory_space<vmem>>, %arg2: memref<32x128xbf16, #tpu.memory_space<vmem>>, %arg3: memref<1x128xf32, #tpu.memory_space<vmem>>, %arg4: memref<256x1xi32, #tpu.memory_space<vmem>>, %arg5: memref<256x128xf32, #tpu.memory_space<vmem>>, %arg6: memref<256x128xbf16, #tpu.memory_space<vmem>>, %arg7: memref<256x1xf32, #tpu.memory_space<vmem>>) attributes {dimension_semantics = [#tpu.dimension_semantics<parallel>], iteration_bounds = array<i64: 1>, scalar_prefetch = 0 : i64, scratch_operands = 0 : i64, tpu.core_type = #tpu.core_type<tc>, window_params = [{transform_indices = @transform_0, window_bounds = array<i64: 256, 32>}, {pipeline_mode = #tpu.pipeline_mode<synchronous>, transform_indices = @transform_1, window_bounds = array<i64: 32, 128>}, {pipeline_mode = #tpu.pipeline_mode<synchronous>, transform_indices = @transform_2, window_bounds = array<i64: 1, 128>}, {transform_indices = @transform_3, window_bounds = array<i64: 256, 1>}, {transform_indices = @transform_4, window_bounds = array<i64: 256, 128>}, {transform_indices = @transform_5, window_bounds = array<i64: 256, 128>}, {transform_indices = @transform_6, window_bounds = array<i64: 256, 1>}]} {
    %c0 = arith.constant 0 : index
    %c0_0 = arith.constant 0 : index
    %0 = vector.load %arg1[%c0, %c0_0] : memref<256x32xbf16, #tpu.memory_space<vmem>>, vector<256x32xbf16>
    %c0_1 = arith.constant 0 : index
    %c0_2 = arith.constant 0 : index
    %1 = vector.load %arg2[%c0_1, %c0_2] : memref<32x128xbf16, #tpu.memory_space<vmem>>, vector<32x128xbf16>
    %cst = arith.constant dense<0.000000e+00> : vector<256x128xf32>
    %2 = tpu.matmul %0, %1, %cst {dimension_numbers = #tpu.dot_dimension_numbers<[1], [0], [0], [1], [0, 0, 1, 1], [], []>} : vector<256x32xbf16>, vector<32x128xbf16>, vector<256x128xf32> -> vector<256x128xf32>
    %c0_3 = arith.constant 0 : index
    %c0_4 = arith.constant 0 : index
    %3 = vector.load %arg3[%c0_3, %c0_4] : memref<1x128xf32, #tpu.memory_space<vmem>>, vector<1x128xf32>
    %4 = vector.broadcast %3 : vector<1x128xf32> to vector<256x128xf32>
    %5 = arith.addf %2, %4 : vector<256x128xf32>
    %c0_5 = arith.constant 0 : index
    %c0_6 = arith.constant 0 : index
    %6 = vector.load %arg5[%c0_5, %c0_6] : memref<256x128xf32, #tpu.memory_space<vmem>>, vector<256x128xf32>
    tpu.vector_store %arg5[%c0_5, %c0_6], %5 {strides = array<i32>} : memref<256x128xf32, #tpu.memory_space<vmem>>, vector<256x128xf32>,
    %7 = tpu.iota {dimensions = array<i32: 1>} : vector<256x128xi32>
    %c10_i32 = arith.constant 10 : i32
    %8 = vector.broadcast %c10_i32 : i32 to vector<256x128xi32>
    %9 = arith.cmpi slt, %7, %8 : vector<256x128xi32>
    %cst_7 = arith.constant 0xFF800000 : f32
    %10 = vector.broadcast %cst_7 : f32 to vector<256x128xf32>
    %11 = arith.select %9, %5, %10 : vector<256x128xi1>, vector<256x128xf32>
    %cst_8 = arith.constant dense<0xFF800000> : vector<256xf32>
    %12 = vector.multi_reduction <maximumf>, %11, %cst_8 [1] : vector<256x128xf32> to vector<256xf32>
    %13 = vector.shape_cast %12 : vector<256xf32> to vector<256x1xf32>
    %14 = vector.broadcast %13 : vector<256x1xf32> to vector<256x128xf32>
    %15 = arith.subf %11, %14 : vector<256x128xf32>
    %16 = math.exp %15 : vector<256x128xf32>
    %cst_9 = arith.constant dense<0.000000e+00> : vector<256xf32>
    %17 = vector.multi_reduction <add>, %16, %cst_9 [1] : vector<256x128xf32> to vector<256xf32>
    %18 = vector.shape_cast %17 : vector<256xf32> to vector<256x1xf32>
    %19 = tpu.reciprocal %18 {approx = true} : vector<256x1xf32> -> vector<256x1xf32>
    %20 = vector.broadcast %19 : vector<256x1xf32> to vector<256x128xf32>
    %21 = arith.mulf %16, %20 : vector<256x128xf32>
    %22 = arith.truncf %21 : vector<256x128xf32> to vector<256x128xbf16>
    %c0_10 = arith.constant 0 : index
    %c0_11 = arith.constant 0 : index
    %23 = vector.load %arg6[%c0_10, %c0_11] : memref<256x128xbf16, #tpu.memory_space<vmem>>, vector<256x128xbf16>
    tpu.vector_store %arg6[%c0_10, %c0_11], %22 {strides = array<i32>} : memref<256x128xbf16, #tpu.memory_space<vmem>>, vector<256x128xbf16>,
    %c0_12 = arith.constant 0 : index
    %c0_13 = arith.constant 0 : index
    %24 = vector.load %arg4[%c0_12, %c0_13] : memref<256x1xi32, #tpu.memory_space<vmem>>, vector<256x1xi32>
    %25 = math.log %18 : vector<256x1xf32>
    %26 = arith.addf %13, %25 : vector<256x1xf32>
    %27 = vector.broadcast %24 : vector<256x1xi32> to vector<256x128xi32>
    %28 = arith.cmpi eq, %7, %27 : vector<256x128xi32>
    %cst_14 = arith.constant 0.000000e+00 : f32
    %29 = vector.broadcast %cst_14 : f32 to vector<256x128xf32>
    %30 = arith.select %28, %5, %29 : vector<256x128xi1>, vector<256x128xf32>
    %cst_15 = arith.constant dense<0.000000e+00> : vector<256xf32>
    %31 = vector.multi_reduction <add>, %30, %cst_15 [1] : vector<256x128xf32> to vector<256xf32>
    %32 = vector.shape_cast %31 : vector<256xf32> to vector<256x1xf32>
    %33 = arith.subf %26, %32 : vector<256x1xf32>
    %c0_16 = arith.constant 0 : index
    %c0_17 = arith.constant 0 : index
    %34 = vector.load %arg7[%c0_16, %c0_17] : memref<256x1xf32, #tpu.memory_space<vmem>>, vector<256x1xf32>
    tpu.vector_store %arg7[%c0_16, %c0_17], %33 {strides = array<i32>} : memref<256x1xf32, #tpu.memory_space<vmem>>, vector<256x1xf32>,
    return
  }
  func.func @transform_0(%arg0: i32) -> (i32, i32) {
    %c0_i32 = arith.constant 0 : i32
    %c0_i32_0 = arith.constant 0 : i32
    return %arg0, %c0_i32 : i32, i32
  }
  func.func @transform_1(%arg0: i32) -> (i32, i32) {
    %c0_i32 = arith.constant 0 : i32
    %c0_i32_0 = arith.constant 0 : i32
    %c0_i32_1 = arith.constant 0 : i32
    return %c0_i32, %c0_i32_0 : i32, i32
  }
  func.func @transform_2(%arg0: i32) -> (i32, i32) {
    %c0_i32 = arith.constant 0 : i32
    %c0_i32_0 = arith.constant 0 : i32
    %c0_i32_1 = arith.constant 0 : i32
    return %c0_i32, %c0_i32_0 : i32, i32
  }
  func.func @transform_3(%arg0: i32) -> (i32, i32) {
    %c0_i32 = arith.constant 0 : i32
    %c0_i32_0 = arith.constant 0 : i32
    return %arg0, %c0_i32 : i32, i32
  }
  func.func @transform_4(%arg0: i32) -> (i32, i32) {
    %c0_i32 = arith.constant 0 : i32
    %c0_i32_0 = arith.constant 0 : i32
    return %arg0, %c0_i32 : i32, i32
  }
  func.func @transform_5(%arg0: i32) -> (i32, i32) {
    %c0_i32 = arith.constant 0 : i32
    %c0_i32_0 = arith.constant 0 : i32
    return %arg0, %c0_i32 : i32, i32
  }
  func.func @transform_6(%arg0: i32) -> (i32, i32) {
    %c0_i32 = arith.constant 0 : i32
    %c0_i32_0 = arith.constant 0 : i32
    return %arg0, %c0_i32 : i32, i32
  }
}

</mosaic_0001>

<llo_original>
// kernel: tpu_custom_call.1
$region0: #{tpu_custom_call.1}
  #allocation0 [shape = 'u32[]', space=smem, size = 0x4, offset = 0x4, fixed_abs, tag = 'smem constant byte address 0x4 - core index']
  #allocation1 [shape = 'u32[72,128]{1,0:T(1,128)}', space=vmem, size = 0x9000, scoped, tag = 'internal scratch']
  %s0 = inlined_call_operand.vmem [shape: bf16[256,32], index: 0, kind: input, shape index: {}]
  %s1 = inlined_call_operand.vmem [shape: bf16[32,128], index: 1, kind: input, shape index: {}]
  %s2 = inlined_call_operand.vmem [shape: f32[1,128], index: 2, kind: input, shape index: {}]
  %s3 = inlined_call_operand.vmem [shape: s32[256,1], index: 3, kind: input, shape index: {}]
  %s4 = inlined_call_operand.hbm [shape: f32[256,128], index: 4, kind: output, shape index: {0}]
  %s5 = inlined_call_operand.hbm [shape: bf16[256,128], index: 5, kind: output, shape index: {1}]
  %s6 = inlined_call_operand.vmem [shape: f32[256,1], index: 6, kind: output, shape index: {2}]
  %7 = xla_tuple %s4, %s5, %s6
  %s8 = sld [smem:[#allocation0]]
  $region42: #{tpu_custom_call.1} parent=0
    _
  %s10 = ssub.s32 1, %s8
  %s11 = scalar_select 0, %s10, %s8
  $region1: #{tpu_custom_call.1} parent=0
    #allocation2 [shape = 'u8[131072]{0}', space=vmem, size = 0x20000, scoped, tag = 'output window, operand 0, single buffered']
    #allocation3 [shape = 's32[1]{0}', space=sflag, size = 0x4, scoped, tag = 'scoped memory for tpu_custom_call.1']
    #allocation4 [shape = 'u8[65536]{0}', space=vmem, size = 0x10000, scoped, tag = 'output window, operand 1, single buffered']
    #allocation5 [shape = 's32[1]{0}', space=sflag, size = 0x4, scoped, tag = 'scoped memory for tpu_custom_call.1']
    %12 = vsyncpa [#allocation3], 0
    %13 = vsyncpa [#allocation5], 0
    // Predicated region
    $region2: #{tpu_custom_call.1} parent=1 // pred_check
      _
    $region3: #{tpu_custom_call.1} parent=1 // pred_check_branch
      %15 = sbr.rel (0) target = $region5
    $region4: #{tpu_custom_call.1} parent=1 // pred_region
      _
    $region5: #{tpu_custom_call.1} parent=1 // pred_fallthru
      _
    // Predicated region
    $region6: #{tpu_custom_call.1} parent=1 // pred_check
      _
    $region7: #{tpu_custom_call.1} parent=1 // pred_check_branch
      %17 = sbr.rel (0) target = $region9
    $region8: #{tpu_custom_call.1} parent=1 // pred_region
      _
    $region9: #{tpu_custom_call.1} parent=1 // pred_fallthru
      _
    // Predicated region
    $region10: #{tpu_custom_call.1} parent=1 // pred_check
      _
    $region11: #{tpu_custom_call.1} parent=1 // pred_check_branch
      %19 = sbr.rel (0) target = $region13
    $region12: #{tpu_custom_call.1} parent=1 // pred_region
      _
    $region13: #{tpu_custom_call.1} parent=1 // pred_fallthru
      _
    // Predicated region
    $region14: #{tpu_custom_call.1} parent=1 // pred_check
      _
    $region15: #{tpu_custom_call.1} parent=1 // pred_check_branch
      %21 = sbr.rel (0) target = $region17
    $region16: #{tpu_custom_call.1} parent=1 // pred_region
      _
    $region17: #{tpu_custom_call.1} parent=1 // pred_fallthru
      _
    %v23 = vld [vmem:[%s0] sm:$0xf]
    %v24 = vld [vmem:[%s0 + $0x4] sm:$0xf]
    %v25 = vld [vmem:[%s0 + $0x8] sm:$0xf]
    %v26 = vld [vmem:[%s0 + $0xc] sm:$0xf]
    %v27 = vld [vmem:[%s0 + $0x10] sm:$0xf]
    %v28 = vld [vmem:[%s0 + $0x14] sm:$0xf]
    %v29 = vld [vmem:[%s0 + $0x18] sm:$0xf]
    %v30 = vld [vmem:[%s0 + $0x1c] sm:$0xf]
    %v31 = vld [vmem:[%s0 + $0x20] sm:$0xf]
    %v32 = vld [vmem:[%s0 + $0x24] sm:$0xf]
    %v33 = vld [vmem:[%s0 + $0x28] sm:$0xf]
    %v34 = vld [vmem:[%s0 + $0x2c] sm:$0xf]
    %v35 = vld [vmem:[%s0 + $0x30] sm:$0xf]
    %v36 = vld [vmem:[%s0 + $0x34] sm:$0xf]
    %v37 = vld [vmem:[%s0 + $0x38] sm:$0xf]
    %v38 = vld [vmem:[%s0 + $0x3c] sm:$0xf]
    %v39 = vld [vmem:[%s0 + $0x40] sm:$0xf]
    %v40 = vld [vmem:[%s0 + $0x44] sm:$0xf]
    %v41 = vld [vmem:[%s0 + $0x48] sm:$0xf]
    %v42 = vld [vmem:[%s0 + $0x4c] sm:$0xf]
    %v43 = vld [vmem:[%s0 + $0x50] sm:$0xf]
    %v44 = vld [vmem:[%s0 + $0x54] sm:$0xf]
    %v45 = vld [vmem:[%s0 + $0x58] sm:$0xf]
    %v46 = vld [vmem:[%s0 + $0x5c] sm:$0xf]
    %v47 = vld [vmem:[%s0 + $0x60] sm:$0xf]
    %v48 = vld [vmem:[%s0 + $0x64] sm:$0xf]
    %v49 = vld [vmem:[%s0 + $0x68] sm:$0xf]
    %v50 = vld [vmem:[%s0 + $0x6c] sm:$0xf]
    %v51 = vld [vmem:[%s0 + $0x70] sm:$0xf]
    %v52 = vld [vmem:[%s0 + $0x74] sm:$0xf]
    %v53 = vld [vmem:[%s0 + $0x78] sm:$0xf]
    %v54 = vld [vmem:[%s0 + $0x7c] sm:$0xf]
    %v55 = vld [vmem:[%s1] sm:$0xf]
    %v56 = vld [vmem:[%s1 + $0x4] sm:$0xf]
    %v57 = vld [vmem:[%s1 + $0x8] sm:$0xf]
    %v58 = vld [vmem:[%s1 + $0xc] sm:$0xf]
    %v59 = vld [vmem:[%s2] sm:$0x1]
    %v61 = vperm.slane %v59, 0
    %v95 = vunpack.c.l.b16 %v23
    %v96 = vunpack.c.l.b16 %v24
    %v97 = vunpack.c.l.b16 %v25
    %v98 = vunpack.c.l.b16 %v26
    %v99 = vunpack.c.l.b16 %v27
    %v100 = vunpack.c.l.b16 %v28
    %v101 = vunpack.c.l.b16 %v29
    %v102 = vunpack.c.l.b16 %v30
    %v103 = vunpack.c.l.b16 %v31
    %v104 = vunpack.c.l.b16 %v32
    %v105 = vunpack.c.l.b16 %v33
    %v106 = vunpack.c.l.b16 %v34
    %v107 = vunpack.c.l.b16 %v35
    %v108 = vunpack.c.l.b16 %v36
    %v109 = vunpack.c.l.b16 %v37
    %v110 = vunpack.c.l.b16 %v38
    %v111 = vunpack.c.l.b16 %v39
    %v112 = vunpack.c.l.b16 %v40
    %v113 = vunpack.c.l.b16 %v41
    %v114 = vunpack.c.l.b16 %v42
    %v115 = vunpack.c.l.b16 %v43
    %v116 = vunpack.c.l.b16 %v44
    %v117 = vunpack.c.l.b16 %v45
    %v118 = vunpack.c.l.b16 %v46
    %v119 = vunpack.c.l.b16 %v47
    %v120 = vunpack.c.l.b16 %v48
    %v121 = vunpack.c.l.b16 %v49
    %v122 = vunpack.c.l.b16 %v50
    %v123 = vunpack.c.l.b16 %v51
    %v124 = vunpack.c.l.b16 %v52
    %v125 = vunpack.c.l.b16 %v53
    %v126 = vunpack.c.l.b16 %v54
    %v127 = vpack.c.b16 %v96, %v95
    %v128 = vpack.c.b16 %v98, %v97
    %v129 = vpack.c.b16 %v100, %v99
    %v130 = vpack.c.b16 %v102, %v101
    %v131 = vpack.c.b16 %v104, %v103
    %v132 = vpack.c.b16 %v106, %v105
    %v133 = vpack.c.b16 %v108, %v107
    %v134 = vpack.c.b16 %v110, %v109
    %v135 = vpack.c.b16 %v112, %v111
    %v136 = vpack.c.b16 %v114, %v113
    %v137 = vpack.c.b16 %v116, %v115
    %v138 = vpack.c.b16 %v118, %v117
    %v139 = vpack.c.b16 %v120, %v119
    %v140 = vpack.c.b16 %v122, %v121
    %v141 = vpack.c.b16 %v124, %v123
    %v142 = vpack.c.b16 %v126, %v125
    %v147 = vunpack.c.l.b16 %v55
    %v148 = vunpack.c.l.b16 %v56
    %v149 = vunpack.c.l.b16 %v57
    %v150 = vunpack.c.l.b16 %v58
    %v151 = vpack.c.b16 %v148, %v147
    %v152 = vpack.c.b16 %v150, %v149
    %vm155 = vcmask 261120
    %v157 = vsel %vm155, %v127, 0
    %v160 = vsel %vm155, %v128, 0
    %v163 = vsel %vm155, %v129, 0
    %v166 = vsel %vm155, %v130, 0
    %v169 = vsel %vm155, %v131, 0
    %v172 = vsel %vm155, %v132, 0
    %v175 = vsel %vm155, %v133, 0
    %v178 = vsel %vm155, %v134, 0
    %v181 = vsel %vm155, %v135, 0
    %v184 = vsel %vm155, %v136, 0
    %v187 = vsel %vm155, %v137, 0
    %v190 = vsel %vm155, %v138, 0
    %v193 = vsel %vm155, %v139, 0
    %v196 = vsel %vm155, %v140, 0
    %v199 = vsel %vm155, %v141, 0
    %v202 = vsel %vm155, %v142, 0
    %204 = vmatpush.bf16.msra.mxu0 0
    %205 = vmatpush.bf16.msra.mxu0 0
    %206 = vmatpush.bf16.msra.mxu0 0
    %207 = vmatpush.bf16.msra.mxu0 0
    %208 = vmatpush.bf16.msra.mxu0 0
    %209 = vmatpush.bf16.msra.mxu0 0
    %210 = vmatpush.bf16.msra.mxu0 %v152
    %211 = vmatpush.bf16.msra.mxu0 %v151
    %212 = vmatmul.bf16.gmra.mxu0 %v157
    %v213 = vpop.f32.mrf.mxu0
    %v214 = vadd.f32 %v61, %v213
    %v215 = vpop.f32.mrf.mxu0
    %v216 = vadd.f32 %v61, %v215
    %217 = vmatmul.bf16.gmra.mxu0 %v160
    %v218 = vpop.f32.mrf.mxu0
    %v219 = vadd.f32 %v61, %v218
    %v220 = vpop.f32.mrf.mxu0
    %v221 = vadd.f32 %v61, %v220
    %222 = vmatmul.bf16.gmra.mxu0 %v163
    %v223 = vpop.f32.mrf.mxu0
    %v224 = vadd.f32 %v61, %v223
    %v225 = vpop.f32.mrf.mxu0
    %v226 = vadd.f32 %v61, %v225
    %227 = vmatmul.bf16.gmra.mxu0 %v166
    %v228 = vpop.f32.mrf.mxu0
    %v229 = vadd.f32 %v61, %v228
    %v230 = vpop.f32.mrf.mxu0
    %v231 = vadd.f32 %v61, %v230
    %232 = vmatmul.bf16.gmra.mxu0 %v169
    %v233 = vpop.f32.mrf.mxu0
    %v234 = vadd.f32 %v61, %v233
    %v235 = vpop.f32.mrf.mxu0
    %v236 = vadd.f32 %v61, %v235
    %237 = vmatmul.bf16.gmra.mxu0 %v172
    %v238 = vpop.f32.mrf.mxu0
    %v239 = vadd.f32 %v61, %v238
    %v240 = vpop.f32.mrf.mxu0
    %v241 = vadd.f32 %v61, %v240
    %242 = vmatmul.bf16.gmra.mxu0 %v175
    %v243 = vpop.f32.mrf.mxu0
    %v244 = vadd.f32 %v61, %v243
    %v245 = vpop.f32.mrf.mxu0
    %v246 = vadd.f32 %v61, %v245
    %247 = vmatmul.bf16.gmra.mxu0 %v178
    %v248 = vpop.f32.mrf.mxu0
    %v249 = vadd.f32 %v61, %v248
    %v250 = vpop.f32.mrf.mxu0
    %v251 = vadd.f32 %v61, %v250
    %252 = vmatmul.bf16.gmra.mxu0 %v181
    %v253 = vpop.f32.mrf.mxu0
    %v254 = vadd.f32 %v61, %v253
    %v255 = vpop.f32.mrf.mxu0
    %v256 = vadd.f32 %v61, %v255
    %257 = vmatmul.bf16.gmra.mxu0 %v184
    %v258 = vpop.f32.mrf.mxu0
    %v259 = vadd.f32 %v61, %v258
    %v260 = vpop.f32.mrf.mxu0
    %v261 = vadd.f32 %v61, %v260
    %262 = vmatmul.bf16.gmra.mxu0 %v187
    %v263 = vpop.f32.mrf.mxu0
    %v264 = vadd.f32 %v61, %v263
    %v265 = vpop.f32.mrf.mxu0
    %v266 = vadd.f32 %v61, %v265
    %267 = vmatmul.bf16.gmra.mxu0 %v190
    %v268 = vpop.f32.mrf.mxu0
    %v269 = vadd.f32 %v61, %v268
    %v270 = vpop.f32.mrf.mxu0
    %v271 = vadd.f32 %v61, %v270
    %272 = vmatmul.bf16.gmra.mxu0 %v193
    %v273 = vpop.f32.mrf.mxu0
    %v274 = vadd.f32 %v61, %v273
    %v275 = vpop.f32.mrf.mxu0
    %v276 = vadd.f32 %v61, %v275
    %277 = vmatmul.bf16.gmra.mxu0 %v196
    %v278 = vpop.f32.mrf.mxu0
    %v279 = vadd.f32 %v61, %v278
    %v280 = vpop.f32.mrf.mxu0
    %v281 = vadd.f32 %v61, %v280
    %282 = vmatmul.bf16.gmra.mxu0 %v199
    %v283 = vpop.f32.mrf.mxu0
    %v284 = vadd.f32 %v61, %v283
    %v285 = vpop.f32.mrf.mxu0
    %v286 = vadd.f32 %v61, %v285
    %287 = vmatmul.bf16.gmra.mxu0 %v202
    %v288 = vpop.f32.mrf.mxu0
    %v289 = vadd.f32 %v61, %v288
    %v290 = vpop.f32.mrf.mxu0
    %v291 = vadd.f32 %v61, %v290
    %292 = vdwg.mxu0
    %293 = vst [vmem:[#allocation2] sm:$0xff] %v214
    %294 = vst [vmem:[#allocation2 + $0x8] sm:$0xff] %v216
    %295 = vst [vmem:[#allocation2 + $0x10] sm:$0xff] %v219
    %296 = vst [vmem:[#allocation2 + $0x18] sm:$0xff] %v221
    %297 = vst [vmem:[#allocation2 + $0x20] sm:$0xff] %v224
    %298 = vst [vmem:[#allocation2 + $0x28] sm:$0xff] %v226
    %299 = vst [vmem:[#allocation2 + $0x30] sm:$0xff] %v229
    %300 = vst [vmem:[#allocation2 + $0x38] sm:$0xff] %v231
    %301 = vst [vmem:[#allocation2 + $0x40] sm:$0xff] %v234
    %302 = vst [vmem:[#allocation2 + $0x48] sm:$0xff] %v236
    %303 = vst [vmem:[#allocation2 + $0x50] sm:$0xff] %v239
    %304 = vst [vmem:[#allocation2 + $0x58] sm:$0xff] %v241
    %305 = vst [vmem:[#allocation2 + $0x60] sm:$0xff] %v244
    %306 = vst [vmem:[#allocation2 + $0x68] sm:$0xff] %v246
    %307 = vst [vmem:[#allocation2 + $0x70] sm:$0xff] %v249
    %308 = vst [vmem:[#allocation2 + $0x78] sm:$0xff] %v251
    %309 = vst [vmem:[#allocation2 + $0x80] sm:$0xff] %v254
    %310 = vst [vmem:[#allocation2 + $0x88] sm:$0xff] %v256
    %311 = vst [vmem:[#allocation2 + $0x90] sm:$0xff] %v259
    %312 = vst [vmem:[#allocation2 + $0x98] sm:$0xff] %v261
    %313 = vst [vmem:[#allocation2 + $0xa0] sm:$0xff] %v264
    %314 = vst [vmem:[#allocation2 + $0xa8] sm:$0xff] %v266
    %315 = vst [vmem:[#allocation2 + $0xb0] sm:$0xff] %v269
    %316 = vst [vmem:[#allocation2 + $0xb8] sm:$0xff] %v271
    %317 = vst [vmem:[#allocation2 + $0xc0] sm:$0xff] %v274
    %318 = vst [vmem:[#allocation2 + $0xc8] sm:$0xff] %v276
    %319 = vst [vmem:[#allocation2 + $0xd0] sm:$0xff] %v279
    %320 = vst [vmem:[#allocation2 + $0xd8] sm:$0xff] %v281
    %321 = vst [vmem:[#allocation2 + $0xe0] sm:$0xff] %v284
    %322 = vst [vmem:[#allocation2 + $0xe8] sm:$0xff] %v286
    %323 = vst [vmem:[#allocation2 + $0xf0] sm:$0xff] %v289
    %324 = vst [vmem:[#allocation2 + $0xf8] sm:$0xff] %v291
    %v325 = vlaneseq
    %v326 = vand.u32 %v325, 127
    %vm327 = vcmp.lt.s32.totalorder %v326, 10
    %v328 = vsel %vm327, %v214, -inf
    %v329 = vsel %vm327, %v216, -inf
    %v330 = vsel %vm327, %v219, -inf
    %v331 = vsel %vm327, %v221, -inf
    %v332 = vsel %vm327, %v224, -inf
    %v333 = vsel %vm327, %v226, -inf
    %v334 = vsel %vm327, %v229, -inf
    %v335 = vsel %vm327, %v231, -inf
    %v336 = vsel %vm327, %v234, -inf
    %v337 = vsel %vm327, %v236, -inf
    %v338 = vsel %vm327, %v239, -inf
    %v339 = vsel %vm327, %v241, -inf
    %v340 = vsel %vm327, %v244, -inf
    %v341 = vsel %vm327, %v246, -inf
    %v342 = vsel %vm327, %v249, -inf
    %v343 = vsel %vm327, %v251, -inf
    %v344 = vsel %vm327, %v254, -inf
    %v345 = vsel %vm327, %v256, -inf
    %v346 = vsel %vm327, %v259, -inf
    %v347 = vsel %vm327, %v261, -inf
    %v348 = vsel %vm327, %v264, -inf
    %v349 = vsel %vm327, %v266, -inf
    %v350 = vsel %vm327, %v269, -inf
    %v351 = vsel %vm327, %v271, -inf
    %v352 = vsel %vm327, %v274, -inf
    %v353 = vsel %vm327, %v276, -inf
    %v354 = vsel %vm327, %v279, -inf
    %v355 = vsel %vm327, %v281, -inf
    %v356 = vsel %vm327, %v284, -inf
    %v357 = vsel %vm327, %v286, -inf
    %v358 = vsel %vm327, %v289, -inf
    %v359 = vsel %vm327, %v291, -inf
    %360 = vmax.xlane.f32.xlu0 %v328
    %v361 = vpop.xlane.xlu0 %360
    %362 = vmax.xlane.f32.xlu0 %v329
    %v363 = vpop.xlane.xlu0 %362
    %364 = vmax.xlane.f32.xlu0 %v330
    %v365 = vpop.xlane.xlu0 %364
    %366 = vmax.xlane.f32.xlu0 %v331
    %v367 = vpop.xlane.xlu0 %366
    %368 = vmax.xlane.f32.xlu0 %v332
    %v369 = vpop.xlane.xlu0 %368
    %370 = vmax.xlane.f32.xlu0 %v333
    %v371 = vpop.xlane.xlu0 %370
    %372 = vmax.xlane.f32.xlu0 %v334
    %v373 = vpop.xlane.xlu0 %372
    %374 = vmax.xlane.f32.xlu0 %v335
    %v375 = vpop.xlane.xlu0 %374
    %376 = vmax.xlane.f32.xlu0 %v336
    %v377 = vpop.xlane.xlu0 %376
    %378 = vmax.xlane.f32.xlu0 %v337
    %v379 = vpop.xlane.xlu0 %378
    %380 = vmax.xlane.f32.xlu0 %v338
    %v381 = vpop.xlane.xlu0 %380
    %382 = vmax.xlane.f32.xlu0 %v339
    %v383 = vpop.xlane.xlu0 %382
    %384 = vmax.xlane.f32.xlu0 %v340
    %v385 = vpop.xlane.xlu0 %384
    %386 = vmax.xlane.f32.xlu0 %v341
    %v387 = vpop.xlane.xlu0 %386
    %388 = vmax.xlane.f32.xlu0 %v342
    %v389 = vpop.xlane.xlu0 %388
    %390 = vmax.xlane.f32.xlu0 %v343
    %v391 = vpop.xlane.xlu0 %390
    %392 = vmax.xlane.f32.xlu0 %v344
    %v393 = vpop.xlane.xlu0 %392
    %394 = vmax.xlane.f32.xlu0 %v345
    %v395 = vpop.xlane.xlu0 %394
    %396 = vmax.xlane.f32.xlu0 %v346
    %v397 = vpop.xlane.xlu0 %396
    %398 = vmax.xlane.f32.xlu0 %v347
    %v399 = vpop.xlane.xlu0 %398
    %400 = vmax.xlane.f32.xlu0 %v348
    %v401 = vpop.xlane.xlu0 %400
    %402 = vmax.xlane.f32.xlu0 %v349
    %v403 = vpop.xlane.xlu0 %402
    %404 = vmax.xlane.f32.xlu0 %v350
    %v405 = vpop.xlane.xlu0 %404
    %406 = vmax.xlane.f32.xlu0 %v351
    %v407 = vpop.xlane.xlu0 %406
    %408 = vmax.xlane.f32.xlu0 %v352
    %v409 = vpop.xlane.xlu0 %408
    %410 = vmax.xlane.f32.xlu0 %v353
    %v411 = vpop.xlane.xlu0 %410
    %412 = vmax.xlane.f32.xlu0 %v354
    %v413 = vpop.xlane.xlu0 %412
    %414 = vmax.xlane.f32.xlu0 %v355
    %v415 = vpop.xlane.xlu0 %414
    %416 = vmax.xlane.f32.xlu0 %v356
    %v417 = vpop.xlane.xlu0 %416
    %418 = vmax.xlane.f32.xlu0 %v357
    %v419 = vpop.xlane.xlu0 %418
    %420 = vmax.xlane.f32.xlu0 %v358
    %v421 = vpop.xlane.xlu0 %420
    %422 = vmax.xlane.f32.xlu0 %v359
    %v423 = vpop.xlane.xlu0 %422
    %v424 = vsub.f32 %v328, %v361
    %v425 = vsub.f32 %v329, %v363
    %v426 = vsub.f32 %v330, %v365
    %v427 = vsub.f32 %v331, %v367
    %v428 = vsub.f32 %v332, %v369
    %v429 = vsub.f32 %v333, %v371
    %v430 = vsub.f32 %v334, %v373
    %v431 = vsub.f32 %v335, %v375
    %v432 = vsub.f32 %v336, %v377
    %v433 = vsub.f32 %v337, %v379
    %v434 = vsub.f32 %v338, %v381
    %v435 = vsub.f32 %v339, %v383
    %v436 = vsub.f32 %v340, %v385
    %v437 = vsub.f32 %v341, %v387
    %v438 = vsub.f32 %v342, %v389
    %v439 = vsub.f32 %v343, %v391
    %v440 = vsub.f32 %v344, %v393
    %v441 = vsub.f32 %v345, %v395
    %v442 = vsub.f32 %v346, %v397
    %v443 = vsub.f32 %v347, %v399
    %v444 = vsub.f32 %v348, %v401
    %v445 = vsub.f32 %v349, %v403
    %v446 = vsub.f32 %v350, %v405
    %v447 = vsub.f32 %v351, %v407
    %v448 = vsub.f32 %v352, %v409
    %v449 = vsub.f32 %v353, %v411
    %v450 = vsub.f32 %v354, %v413
    %v451 = vsub.f32 %v355, %v415
    %v452 = vsub.f32 %v356, %v417
    %v453 = vsub.f32 %v357, %v419
    %v454 = vsub.f32 %v358, %v421
    %v455 = vsub.f32 %v359, %v423
    %v456 = vmul.f32 %v424, 1.442695
    %v457 = vpow.pop %v456
    %v458 = vmul.f32 %v425, 1.442695
    %v459 = vpow.pop %v458
    %v460 = vmul.f32 %v426, 1.442695
    %v461 = vpow.pop %v460
    %v462 = vmul.f32 %v427, 1.442695
    %v463 = vpow.pop %v462
    %v464 = vmul.f32 %v428, 1.442695
    %v465 = vpow.pop %v464
    %v466 = vmul.f32 %v429, 1.442695
    %v467 = vpow.pop %v466
    %v468 = vmul.f32 %v430, 1.442695
    %v469 = vpow.pop %v468
    %v470 = vmul.f32 %v431, 1.442695
    %v471 = vpow.pop %v470
    %v472 = vmul.f32 %v432, 1.442695
    %v473 = vpow.pop %v472
    %v474 = vmul.f32 %v433, 1.442695
    %v475 = vpow.pop %v474
    %v476 = vmul.f32 %v434, 1.442695
    %v477 = vpow.pop %v476
    %v478 = vmul.f32 %v435, 1.442695
    %v479 = vpow.pop %v478
    %v480 = vmul.f32 %v436, 1.442695
    %v481 = vpow.pop %v480
    %v482 = vmul.f32 %v437, 1.442695
    %v483 = vpow.pop %v482
    %v484 = vmul.f32 %v438, 1.442695
    %v485 = vpow.pop %v484
    %v486 = vmul.f32 %v439, 1.442695
    %v487 = vpow.pop %v486
    %v488 = vmul.f32 %v440, 1.442695
    %v489 = vpow.pop %v488
    %v490 = vmul.f32 %v441, 1.442695
    %v491 = vpow.pop %v490
    %v492 = vmul.f32 %v442, 1.442695
    %v493 = vpow.pop %v492
    %v494 = vmul.f32 %v443, 1.442695
    %v495 = vpow.pop %v494
    %v496 = vmul.f32 %v444, 1.442695
    %v497 = vpow.pop %v496
    %v498 = vmul.f32 %v445, 1.442695
    %v499 = vpow.pop %v498
    %v500 = vmul.f32 %v446, 1.442695
    %v501 = vpow.pop %v500
    %v502 = vmul.f32 %v447, 1.442695
    %v503 = vpow.pop %v502
    %v504 = vmul.f32 %v448, 1.442695
    %v505 = vpow.pop %v504
    %v506 = vmul.f32 %v449, 1.442695
    %v507 = vpow.pop %v506
    %v508 = vmul.f32 %v450, 1.442695
    %v509 = vpow.pop %v508
    %v510 = vmul.f32 %v451, 1.442695
    %v511 = vpow.pop %v510
    %v512 = vmul.f32 %v452, 1.442695
    %v513 = vpow.pop %v512
    %v514 = vmul.f32 %v453, 1.442695
    %v515 = vpow.pop %v514
    %v516 = vmul.f32 %v454, 1.442695
    %v517 = vpow.pop %v516
    %v518 = vmul.f32 %v455, 1.442695
    %v519 = vpow.pop %v518
    %520 = vadd.xlane.f32.xlu0 %v457
    %v521 = vpop.xlane.xlu0 %520
    %522 = vadd.xlane.f32.xlu0 %v459
    %v523 = vpop.xlane.xlu0 %522
    %524 = vadd.xlane.f32.xlu0 %v461
    %v525 = vpop.xlane.xlu0 %524
    %526 = vadd.xlane.f32.xlu0 %v463
    %v527 = vpop.xlane.xlu0 %526
    %528 = vadd.xlane.f32.xlu0 %v465
    %v529 = vpop.xlane.xlu0 %528
    %530 = vadd.xlane.f32.xlu0 %v467
    %v531 = vpop.xlane.xlu0 %530
    %532 = vadd.xlane.f32.xlu0 %v469
    %v533 = vpop.xlane.xlu0 %532
    %534 = vadd.xlane.f32.xlu0 %v471
    %v535 = vpop.xlane.xlu0 %534
    %536 = vadd.xlane.f32.xlu0 %v473
    %v537 = vpop.xlane.xlu0 %536
    %538 = vadd.xlane.f32.xlu0 %v475
    %v539 = vpop.xlane.xlu0 %538
    %540 = vadd.xlane.f32.xlu0 %v477
    %v541 = vpop.xlane.xlu0 %540
    %542 = vadd.xlane.f32.xlu0 %v479
    %v543 = vpop.xlane.xlu0 %542
    %544 = vadd.xlane.f32.xlu0 %v481
    %v545 = vpop.xlane.xlu0 %544
    %546 = vadd.xlane.f32.xlu0 %v483
    %v547 = vpop.xlane.xlu0 %546
    %548 = vadd.xlane.f32.xlu0 %v485
    %v549 = vpop.xlane.xlu0 %548
    %550 = vadd.xlane.f32.xlu0 %v487
    %v551 = vpop.xlane.xlu0 %550
    %552 = vadd.xlane.f32.xlu0 %v489
    %v553 = vpop.xlane.xlu0 %552
    %554 = vadd.xlane.f32.xlu0 %v491
    %v555 = vpop.xlane.xlu0 %554
    %556 = vadd.xlane.f32.xlu0 %v493
    %v557 = vpop.xlane.xlu0 %556
    %558 = vadd.xlane.f32.xlu0 %v495
    %v559 = vpop.xlane.xlu0 %558
    %560 = vadd.xlane.f32.xlu0 %v497
    %v561 = vpop.xlane.xlu0 %560
    %562 = vadd.xlane.f32.xlu0 %v499
    %v563 = vpop.xlane.xlu0 %562
    %564 = vadd.xlane.f32.xlu0 %v501
    %v565 = vpop.xlane.xlu0 %564
    %566 = vadd.xlane.f32.xlu0 %v503
    %v567 = vpop.xlane.xlu0 %566
    %568 = vadd.xlane.f32.xlu0 %v505
    %v569 = vpop.xlane.xlu0 %568
    %570 = vadd.xlane.f32.xlu0 %v507
    %v571 = vpop.xlane.xlu0 %570
    %572 = vadd.xlane.f32.xlu0 %v509
    %v573 = vpop.xlane.xlu0 %572
    %574 = vadd.xlane.f32.xlu0 %v511
    %v575 = vpop.xlane.xlu0 %574
    %576 = vadd.xlane.f32.xlu0 %v513
    %v577 = vpop.xlane.xlu0 %576
    %578 = vadd.xlane.f32.xlu0 %v515
    %v579 = vpop.xlane.xlu0 %578
    %580 = vadd.xlane.f32.xlu0 %v517
    %v581 = vpop.xlane.xlu0 %580
    %582 = vadd.xlane.f32.xlu0 %v519
    %v583 = vpop.xlane.xlu0 %582
    %v584 = vrcp.pop %v521
    %v585 = vrcp.pop %v523
    %v586 = vrcp.pop %v525
    %v587 = vrcp.pop %v527
    %v588 = vrcp.pop %v529
    %v589 = vrcp.pop %v531
    %v590 = vrcp.pop %v533
    %v591 = vrcp.pop %v535
    %v592 = vrcp.pop %v537
    %v593 = vrcp.pop %v539
    %v594 = vrcp.pop %v541
    %v595 = vrcp.pop %v543
    %v596 = vrcp.pop %v545
    %v597 = vrcp.pop %v547
    %v598 = vrcp.pop %v549
    %v599 = vrcp.pop %v551
    %v600 = vrcp.pop %v553
    %v601 = vrcp.pop %v555
    %v602 = vrcp.pop %v557
    %v603 = vrcp.pop %v559
    %v604 = vrcp.pop %v561
    %v605 = vrcp.pop %v563
    %v606 = vrcp.pop %v565
    %v607 = vrcp.pop %v567
    %v608 = vrcp.pop %v569
    %v609 = vrcp.pop %v571
    %v610 = vrcp.pop %v573
    %v611 = vrcp.pop %v575
    %v612 = vrcp.pop %v577
    %v613 = vrcp.pop %v579
    %v614 = vrcp.pop %v581
    %v615 = vrcp.pop %v583
    %v616 = vmul.f32 %v457, %v584
    %v617 = vmul.f32 %v459, %v585
    %v618 = vmul.f32 %v461, %v586
    %v619 = vmul.f32 %v463, %v587
    %v620 = vmul.f32 %v465, %v588
    %v621 = vmul.f32 %v467, %v589
    %v622 = vmul.f32 %v469, %v590
    %v623 = vmul.f32 %v471, %v591
    %v624 = vmul.f32 %v473, %v592
    %v625 = vmul.f32 %v475, %v593
    %v626 = vmul.f32 %v477, %v594
    %v627 = vmul.f32 %v479, %v595
    %v628 = vmul.f32 %v481, %v596
    %v629 = vmul.f32 %v483, %v597
    %v630 = vmul.f32 %v485, %v598
    %v631 = vmul.f32 %v487, %v599
    %v632 = vmul.f32 %v489, %v600
    %v633 = vmul.f32 %v491, %v601
    %v634 = vmul.f32 %v493, %v602
    %v635 = vmul.f32 %v495, %v603
    %v636 = vmul.f32 %v497, %v604
    %v637 = vmul.f32 %v499, %v605
    %v638 = vmul.f32 %v501, %v606
    %v639 = vmul.f32 %v503, %v607
    %v640 = vmul.f32 %v505, %v608
    %v641 = vmul.f32 %v507, %v609
    %v642 = vmul.f32 %v509, %v610
    %v643 = vmul.f32 %v511, %v611
    %v644 = vmul.f32 %v513, %v612
    %v645 = vmul.f32 %v515, %v613
    %v646 = vmul.f32 %v517, %v614
    %v647 = vmul.f32 %v519, %v615
    %v648 = vpack.c.bf16 %v616, %v616
    %v649 = vpack.c.bf16 %v617, %v617
    %v650 = vpack.c.bf16 %v618, %v618
    %v651 = vpack.c.bf16 %v619, %v619
    %v652 = vpack.c.bf16 %v620, %v620
    %v653 = vpack.c.bf16 %v621, %v621
    %v654 = vpack.c.bf16 %v622, %v622
    %v655 = vpack.c.bf16 %v623, %v623
    %v656 = vpack.c.bf16 %v624, %v624
    %v657 = vpack.c.bf16 %v625, %v625
    %v658 = vpack.c.bf16 %v626, %v626
    %v659 = vpack.c.bf16 %v627, %v627
    %v660 = vpack.c.bf16 %v628, %v628
    %v661 = vpack.c.bf16 %v629, %v629
    %v662 = vpack.c.bf16 %v630, %v630
    %v663 = vpack.c.bf16 %v631, %v631
    %v664 = vpack.c.bf16 %v632, %v632
    %v665 = vpack.c.bf16 %v633, %v633
    %v666 = vpack.c.bf16 %v634, %v634
    %v667 = vpack.c.bf16 %v635, %v635
    %v668 = vpack.c.bf16 %v636, %v636
    %v669 = vpack.c.bf16 %v637, %v637
    %v670 = vpack.c.bf16 %v638, %v638
    %v671 = vpack.c.bf16 %v639, %v639
    %v672 = vpack.c.bf16 %v640, %v640
    %v673 = vpack.c.bf16 %v641, %v641
    %v674 = vpack.c.bf16 %v642, %v642
    %v675 = vpack.c.bf16 %v643, %v643
    %v676 = vpack.c.bf16 %v644, %v644
    %v677 = vpack.c.bf16 %v645, %v645
    %v678 = vpack.c.bf16 %v646, %v646
    %v679 = vpack.c.bf16 %v647, %v647
    %680 = vst [vmem:[#allocation4] sm:$0xf] %v648
    %681 = vst [vmem:[#allocation4 + $0x4] sm:$0xf] %v649
    %682 = vst [vmem:[#allocation4 + $0x8] sm:$0xf] %v650
    %683 = vst [vmem:[#allocation4 + $0xc] sm:$0xf] %v651
    %684 = vst [vmem:[#allocation4 + $0x10] sm:$0xf] %v652
    %685 = vst [vmem:[#allocation4 + $0x14] sm:$0xf] %v653
    %686 = vst [vmem:[#allocation4 + $0x18] sm:$0xf] %v654
    %687 = vst [vmem:[#allocation4 + $0x1c] sm:$0xf] %v655
    %688 = vst [vmem:[#allocation4 + $0x20] sm:$0xf] %v656
    %689 = vst [vmem:[#allocation4 + $0x24] sm:$0xf] %v657
    %690 = vst [vmem:[#allocation4 + $0x28] sm:$0xf] %v658
    %691 = vst [vmem:[#allocation4 + $0x2c] sm:$0xf] %v659
    %692 = vst [vmem:[#allocation4 + $0x30] sm:$0xf] %v660
    %693 = vst [vmem:[#allocation4 + $0x34] sm:$0xf] %v661
    %694 = vst [vmem:[#allocation4 + $0x38] sm:$0xf] %v662
    %695 = vst [vmem:[#allocation4 + $0x3c] sm:$0xf] %v663
    %696 = vst [vmem:[#allocation4 + $0x40] sm:$0xf] %v664
    %697 = vst [vmem:[#allocation4 + $0x44] sm:$0xf] %v665
    %698 = vst [vmem:[#allocation4 + $0x48] sm:$0xf] %v666
    %699 = vst [vmem:[#allocation4 + $0x4c] sm:$0xf] %v667
    %700 = vst [vmem:[#allocation4 + $0x50] sm:$0xf] %v668
    %701 = vst [vmem:[#allocation4 + $0x54] sm:$0xf] %v669
    %702 = vst [vmem:[#allocation4 + $0x58] sm:$0xf] %v670
    %703 = vst [vmem:[#allocation4 + $0x5c] sm:$0xf] %v671
    %704 = vst [vmem:[#allocation4 + $0x60] sm:$0xf] %v672
    %705 = vst [vmem:[#allocation4 + $0x64] sm:$0xf] %v673
    %706 = vst [vmem:[#allocation4 + $0x68] sm:$0xf] %v674
    %707 = vst [vmem:[#allocation4 + $0x6c] sm:$0xf] %v675
    %708 = vst [vmem:[#allocation4 + $0x70] sm:$0xf] %v676
    %709 = vst [vmem:[#allocation4 + $0x74] sm:$0xf] %v677
    %710 = vst [vmem:[#allocation4 + $0x78] sm:$0xf] %v678
    %711 = vst [vmem:[#allocation4 + $0x7c] sm:$0xf] %v679
    %v712 = vld [vmem:[%s3] sm:$0xff]
    %v713 = vld [vmem:[%s3 + $0x8] sm:$0xff]
    %v714 = vld [vmem:[%s3 + $0x10] sm:$0xff]
    %v715 = vld [vmem:[%s3 + $0x18] sm:$0xff]
    %v716 = vld [vmem:[%s3 + $0x20] sm:$0xff]
    %v717 = vld [vmem:[%s3 + $0x28] sm:$0xff]
    %v718 = vld [vmem:[%s3 + $0x30] sm:$0xff]
    %v719 = vld [vmem:[%s3 + $0x38] sm:$0xff]
    %v720 = vld [vmem:[%s3 + $0x40] sm:$0xff]
    %v721 = vld [vmem:[%s3 + $0x48] sm:$0xff]
    %v722 = vld [vmem:[%s3 + $0x50] sm:$0xff]
    %v723 = vld [vmem:[%s3 + $0x58] sm:$0xff]
    %v724 = vld [vmem:[%s3 + $0x60] sm:$0xff]
    %v725 = vld [vmem:[%s3 + $0x68] sm:$0xff]
    %v726 = vld [vmem:[%s3 + $0x70] sm:$0xff]
    %v727 = vld [vmem:[%s3 + $0x78] sm:$0xff]
    %v728 = vld [vmem:[%s3 + $0x80] sm:$0xff]
    %v729 = vld [vmem:[%s3 + $0x88] sm:$0xff]
    %v730 = vld [vmem:[%s3 + $0x90] sm:$0xff]
    %v731 = vld [vmem:[%s3 + $0x98] sm:$0xff]
    %v732 = vld [vmem:[%s3 + $0xa0] sm:$0xff]
    %v733 = vld [vmem:[%s3 + $0xa8] sm:$0xff]
    %v734 = vld [vmem:[%s3 + $0xb0] sm:$0xff]
    %v735 = vld [vmem:[%s3 + $0xb8] sm:$0xff]
    %v736 = vld [vmem:[%s3 + $0xc0] sm:$0xff]
    %v737 = vld [vmem:[%s3 + $0xc8] sm:$0xff]
    %v738 = vld [vmem:[%s3 + $0xd0] sm:$0xff]
    %v739 = vld [vmem:[%s3 + $0xd8] sm:$0xff]
    %v740 = vld [vmem:[%s3 + $0xe0] sm:$0xff]
    %v741 = vld [vmem:[%s3 + $0xe8] sm:$0xff]
    %v742 = vld [vmem:[%s3 + $0xf0] sm:$0xff]
    %v743 = vld [vmem:[%s3 + $0xf8] sm:$0xff]
    %v744 = vlog2.pop %v521
    %v745 = vmul.f32 %v744, 0.6931472
    %v746 = vlog2.pop %v523
    %v747 = vmul.f32 %v746, 0.6931472
    %v748 = vlog2.pop %v525
    %v749 = vmul.f32 %v748, 0.6931472
    %v750 = vlog2.pop %v527
    %v751 = vmul.f32 %v750, 0.6931472
    %v752 = vlog2.pop %v529
    %v753 = vmul.f32 %v752, 0.6931472
    %v754 = vlog2.pop %v531
    %v755 = vmul.f32 %v754, 0.6931472
    %v756 = vlog2.pop %v533
    %v757 = vmul.f32 %v756, 0.6931472
    %v758 = vlog2.pop %v535
    %v759 = vmul.f32 %v758, 0.6931472
    %v760 = vlog2.pop %v537
    %v761 = vmul.f32 %v760, 0.6931472
    %v762 = vlog2.pop %v539
    %v763 = vmul.f32 %v762, 0.6931472
    %v764 = vlog2.pop %v541
    %v765 = vmul.f32 %v764, 0.6931472
    %v766 = vlog2.pop %v543
    %v767 = vmul.f32 %v766, 0.6931472
    %v768 = vlog2.pop %v545
    %v769 = vmul.f32 %v768, 0.6931472
    %v770 = vlog2.pop %v547
    %v771 = vmul.f32 %v770, 0.6931472
    %v772 = vlog2.pop %v549
    %v773 = vmul.f32 %v772, 0.6931472
    %v774 = vlog2.pop %v551
    %v775 = vmul.f32 %v774, 0.6931472
    %v776 = vlog2.pop %v553
    %v777 = vmul.f32 %v776, 0.6931472
    %v778 = vlog2.pop %v555
    %v779 = vmul.f32 %v778, 0.6931472
    %v780 = vlog2.pop %v557
    %v781 = vmul.f32 %v780, 0.6931472
    %v782 = vlog2.pop %v559
    %v783 = vmul.f32 %v782, 0.6931472
    %v784 = vlog2.pop %v561
    %v785 = vmul.f32 %v784, 0.6931472
    %v786 = vlog2.pop %v563
    %v787 = vmul.f32 %v786, 0.6931472
    %v788 = vlog2.pop %v565
    %v789 = vmul.f32 %v788, 0.6931472
    %v790 = vlog2.pop %v567
    %v791 = vmul.f32 %v790, 0.6931472
    %v792 = vlog2.pop %v569
    %v793 = vmul.f32 %v792, 0.6931472
    %v794 = vlog2.pop %v571
    %v795 = vmul.f32 %v794, 0.6931472
    %v796 = vlog2.pop %v573
    %v797 = vmul.f32 %v796, 0.6931472
    %v798 = vlog2.pop %v575
    %v799 = vmul.f32 %v798, 0.6931472
    %v800 = vlog2.pop %v577
    %v801 = vmul.f32 %v800, 0.6931472
    %v802 = vlog2.pop %v579
    %v803 = vmul.f32 %v802, 0.6931472
    %v804 = vlog2.pop %v581
    %v805 = vmul.f32 %v804, 0.6931472
    %v806 = vlog2.pop %v583
    %v807 = vmul.f32 %v806, 0.6931472
    %v808 = vadd.f32 %v361, %v745
    %v809 = vadd.f32 %v363, %v747
    %v810 = vadd.f32 %v365, %v749
    %v811 = vadd.f32 %v367, %v751
    %v812 = vadd.f32 %v369, %v753
    %v813 = vadd.f32 %v371, %v755
    %v814 = vadd.f32 %v373, %v757
    %v815 = vadd.f32 %v375, %v759
    %v816 = vadd.f32 %v377, %v761
    %v817 = vadd.f32 %v379, %v763
    %v818 = vadd.f32 %v381, %v765
    %v819 = vadd.f32 %v383, %v767
    %v820 = vadd.f32 %v385, %v769
    %v821 = vadd.f32 %v387, %v771
    %v822 = vadd.f32 %v389, %v773
    %v823 = vadd.f32 %v391, %v775
    %v824 = vadd.f32 %v393, %v777
    %v825 = vadd.f32 %v395, %v779
    %v826 = vadd.f32 %v397, %v781
    %v827 = vadd.f32 %v399, %v783
    %v828 = vadd.f32 %v401, %v785
    %v829 = vadd.f32 %v403, %v787
    %v830 = vadd.f32 %v405, %v789
    %v831 = vadd.f32 %v407, %v791
    %v832 = vadd.f32 %v409, %v793
    %v833 = vadd.f32 %v411, %v795
    %v834 = vadd.f32 %v413, %v797
    %v835 = vadd.f32 %v415, %v799
    %v836 = vadd.f32 %v417, %v801
    %v837 = vadd.f32 %v419, %v803
    %v838 = vadd.f32 %v421, %v805
    %v839 = vadd.f32 %v423, %v807
    %840 = vset.pattern.permute.xlu0 0
    %841 = vperm.xlu0 %840, %v712
    %v842 = vpop.permute.xlu0 %841
    %843 = vset.pattern.permute.xlu0 0
    %844 = vperm.xlu0 %843, %v713
    %v845 = vpop.permute.xlu0 %844
    %846 = vset.pattern.permute.xlu0 0
    %847 = vperm.xlu0 %846, %v714
    %v848 = vpop.permute.xlu0 %847
    %849 = vset.pattern.permute.xlu0 0
    %850 = vperm.xlu0 %849, %v715
    %v851 = vpop.permute.xlu0 %850
    %852 = vset.pattern.permute.xlu0 0
    %853 = vperm.xlu0 %852, %v716
    %v854 = vpop.permute.xlu0 %853
    %855 = vset.pattern.permute.xlu0 0
    %856 = vperm.xlu0 %855, %v717
    %v857 = vpop.permute.xlu0 %856
    %858 = vset.pattern.permute.xlu0 0
    %859 = vperm.xlu0 %858, %v718
    %v860 = vpop.permute.xlu0 %859
    %861 = vset.pattern.permute.xlu0 0
    %862 = vperm.xlu0 %861, %v719
    %v863 = vpop.permute.xlu0 %862
    %864 = vset.pattern.permute.xlu0 0
    %865 = vperm.xlu0 %864, %v720
    %v866 = vpop.permute.xlu0 %865
    %867 = vset.pattern.permute.xlu0 0
    %868 = vperm.xlu0 %867, %v721
    %v869 = vpop.permute.xlu0 %868
    %870 = vset.pattern.permute.xlu0 0
    %871 = vperm.xlu0 %870, %v722
    %v872 = vpop.permute.xlu0 %871
    %873 = vset.pattern.permute.xlu0 0
    %874 = vperm.xlu0 %873, %v723
    %v875 = vpop.permute.xlu0 %874
    %876 = vset.pattern.permute.xlu0 0
    %877 = vperm.xlu0 %876, %v724
    %v878 = vpop.permute.xlu0 %877
    %879 = vset.pattern.permute.xlu0 0
    %880 = vperm.xlu0 %879, %v725
    %v881 = vpop.permute.xlu0 %880
    %882 = vset.pattern.permute.xlu0 0
    %883 = vperm.xlu0 %882, %v726
    %v884 = vpop.permute.xlu0 %883
    %885 = vset.pattern.permute.xlu0 0
    %886 = vperm.xlu0 %885, %v727
    %v887 = vpop.permute.xlu0 %886
    %888 = vset.pattern.permute.xlu0 0
    %889 = vperm.xlu0 %888, %v728
    %v890 = vpop.permute.xlu0 %889
    %891 = vset.pattern.permute.xlu0 0
    %892 = vperm.xlu0 %891, %v729
    %v893 = vpop.permute.xlu0 %892
    %894 = vset.pattern.permute.xlu0 0
    %895 = vperm.xlu0 %894, %v730
    %v896 = vpop.permute.xlu0 %895
    %897 = vset.pattern.permute.xlu0 0
    %898 = vperm.xlu0 %897, %v731
    %v899 = vpop.permute.xlu0 %898
    %900 = vset.pattern.permute.xlu0 0
    %901 = vperm.xlu0 %900, %v732
    %v902 = vpop.permute.xlu0 %901
    %903 = vset.pattern.permute.xlu0 0
    %904 = vperm.xlu0 %903, %v733
    %v905 = vpop.permute.xlu0 %904
    %906 = vset.pattern.permute.xlu0 0
    %907 = vperm.xlu0 %906, %v734
    %v908 = vpop.permute.xlu0 %907
    %909 = vset.pattern.permute.xlu0 0
    %910 = vperm.xlu0 %909, %v735
    %v911 = vpop.permute.xlu0 %910
    %912 = vset.pattern.permute.xlu0 0
    %913 = vperm.xlu0 %912, %v736
    %v914 = vpop.permute.xlu0 %913
    %915 = vset.pattern.permute.xlu0 0
    %916 = vperm.xlu0 %915, %v737
    %v917 = vpop.permute.xlu0 %916
    %918 = vset.pattern.permute.xlu0 0
    %919 = vperm.xlu0 %918, %v738
    %v920 = vpop.permute.xlu0 %919
    %921 = vset.pattern.permute.xlu0 0
    %922 = vperm.xlu0 %921, %v739
    %v923 = vpop.permute.xlu0 %922
    %924 = vset.pattern.permute.xlu0 0
    %925 = vperm.xlu0 %924, %v740
    %v926 = vpop.permute.xlu0 %925
    %927 = vset.pattern.permute.xlu0 0
    %928 = vperm.xlu0 %927, %v741
    %v929 = vpop.permute.xlu0 %928
    %930 = vset.pattern.permute.xlu0 0
    %931 = vperm.xlu0 %930, %v742
    %v932 = vpop.permute.xlu0 %931
    %933 = vset.pattern.permute.xlu0 0
    %934 = vperm.xlu0 %933, %v743
    %v935 = vpop.permute.xlu0 %934
    %vm936 = vcmp.eq.s32.totalorder %v326, %v842
    %vm937 = vcmp.eq.s32.totalorder %v326, %v845
    %vm938 = vcmp.eq.s32.totalorder %v326, %v848
    %vm939 = vcmp.eq.s32.totalorder %v326, %v851
    %vm940 = vcmp.eq.s32.totalorder %v326, %v854
    %vm941 = vcmp.eq.s32.totalorder %v326, %v857
    %vm942 = vcmp.eq.s32.totalorder %v326, %v860
    %vm943 = vcmp.eq.s32.totalorder %v326, %v863
    %vm944 = vcmp.eq.s32.totalorder %v326, %v866
    %vm945 = vcmp.eq.s32.totalorder %v326, %v869
    %vm946 = vcmp.eq.s32.totalorder %v326, %v872
    %vm947 = vcmp.eq.s32.totalorder %v326, %v875
    %vm948 = vcmp.eq.s32.totalorder %v326, %v878
    %vm949 = vcmp.eq.s32.totalorder %v326, %v881
    %vm950 = vcmp.eq.s32.totalorder %v326, %v884
    %vm951 = vcmp.eq.s32.totalorder %v326, %v887
    %vm952 = vcmp.eq.s32.totalorder %v326, %v890
    %vm953 = vcmp.eq.s32.totalorder %v326, %v893
    %vm954 = vcmp.eq.s32.totalorder %v326, %v896
    %vm955 = vcmp.eq.s32.totalorder %v326, %v899
    %vm956 = vcmp.eq.s32.totalorder %v326, %v902
    %vm957 = vcmp.eq.s32.totalorder %v326, %v905
    %vm958 = vcmp.eq.s32.totalorder %v326, %v908
    %vm959 = vcmp.eq.s32.totalorder %v326, %v911
    %vm960 = vcmp.eq.s32.totalorder %v326, %v914
    %vm961 = vcmp.eq.s32.totalorder %v326, %v917
    %vm962 = vcmp.eq.s32.totalorder %v326, %v920
    %vm963 = vcmp.eq.s32.totalorder %v326, %v923
    %vm964 = vcmp.eq.s32.totalorder %v326, %v926
    %vm965 = vcmp.eq.s32.totalorder %v326, %v929
    %vm966 = vcmp.eq.s32.totalorder %v326, %v932
    %vm967 = vcmp.eq.s32.totalorder %v326, %v935
    %v968 = vsel %vm936, %v214, 0.0
    %v969 = vsel %vm937, %v216, 0.0
    %v970 = vsel %vm938, %v219, 0.0
    %v971 = vsel %vm939, %v221, 0.0
    %v972 = vsel %vm940, %v224, 0.0
    %v973 = vsel %vm941, %v226, 0.0
    %v974 = vsel %vm942, %v229, 0.0
    %v975 = vsel %vm943, %v231, 0.0
    %v976 = vsel %vm944, %v234, 0.0
    %v977 = vsel %vm945, %v236, 0.0
    %v978 = vsel %vm946, %v239, 0.0
    %v979 = vsel %vm947, %v241, 0.0
    %v980 = vsel %vm948, %v244, 0.0
    %v981 = vsel %vm949, %v246, 0.0
    %v982 = vsel %vm950, %v249, 0.0
    %v983 = vsel %vm951, %v251, 0.0
    %v984 = vsel %vm952, %v254, 0.0
    %v985 = vsel %vm953, %v256, 0.0
    %v986 = vsel %vm954, %v259, 0.0
    %v987 = vsel %vm955, %v261, 0.0
    %v988 = vsel %vm956, %v264, 0.0
    %v989 = vsel %vm957, %v266, 0.0
    %v990 = vsel %vm958, %v269, 0.0
    %v991 = vsel %vm959, %v271, 0.0
    %v992 = vsel %vm960, %v274, 0.0
    %v993 = vsel %vm961, %v276, 0.0
    %v994 = vsel %vm962, %v279, 0.0
    %v995 = vsel %vm963, %v281, 0.0
    %v996 = vsel %vm964, %v284, 0.0
    %v997 = vsel %vm965, %v286, 0.0
    %v998 = vsel %vm966, %v289, 0.0
    %v999 = vsel %vm967, %v291, 0.0
    %1000 = vadd.xlane.f32.xlu0 %v968
    %v1001 = vpop.xlane.xlu0 %1000
    %1002 = vadd.xlane.f32.xlu0 %v969
    %v1003 = vpop.xlane.xlu0 %1002
    %1004 = vadd.xlane.f32.xlu0 %v970
    %v1005 = vpop.xlane.xlu0 %1004
    %1006 = vadd.xlane.f32.xlu0 %v971
    %v1007 = vpop.xlane.xlu0 %1006
    %1008 = vadd.xlane.f32.xlu0 %v972
    %v1009 = vpop.xlane.xlu0 %1008
    %1010 = vadd.xlane.f32.xlu0 %v973
    %v1011 = vpop.xlane.xlu0 %1010
    %1012 = vadd.xlane.f32.xlu0 %v974
    %v1013 = vpop.xlane.xlu0 %1012
    %1014 = vadd.xlane.f32.xlu0 %v975
    %v1015 = vpop.xlane.xlu0 %1014
    %1016 = vadd.xlane.f32.xlu0 %v976
    %v1017 = vpop.xlane.xlu0 %1016
    %1018 = vadd.xlane.f32.xlu0 %v977
    %v1019 = vpop.xlane.xlu0 %1018
    %1020 = vadd.xlane.f32.xlu0 %v978
    %v1021 = vpop.xlane.xlu0 %1020
    %1022 = vadd.xlane.f32.xlu0 %v979
    %v1023 = vpop.xlane.xlu0 %1022
    %1024 = vadd.xlane.f32.xlu0 %v980
    %v1025 = vpop.xlane.xlu0 %1024
    %1026 = vadd.xlane.f32.xlu0 %v981
    %v1027 = vpop.xlane.xlu0 %1026
    %1028 = vadd.xlane.f32.xlu0 %v982
    %v1029 = vpop.xlane.xlu0 %1028
    %1030 = vadd.xlane.f32.xlu0 %v983
    %v1031 = vpop.xlane.xlu0 %1030
    %1032 = vadd.xlane.f32.xlu0 %v984
    %v1033 = vpop.xlane.xlu0 %1032
    %1034 = vadd.xlane.f32.xlu0 %v985
    %v1035 = vpop.xlane.xlu0 %1034
    %1036 = vadd.xlane.f32.xlu0 %v986
    %v1037 = vpop.xlane.xlu0 %1036
    %1038 = vadd.xlane.f32.xlu0 %v987
    %v1039 = vpop.xlane.xlu0 %1038
    %1040 = vadd.xlane.f32.xlu0 %v988
    %v1041 = vpop.xlane.xlu0 %1040
    %1042 = vadd.xlane.f32.xlu0 %v989
    %v1043 = vpop.xlane.xlu0 %1042
    %1044 = vadd.xlane.f32.xlu0 %v990
    %v1045 = vpop.xlane.xlu0 %1044
    %1046 = vadd.xlane.f32.xlu0 %v991
    %v1047 = vpop.xlane.xlu0 %1046
    %1048 = vadd.xlane.f32.xlu0 %v992
    %v1049 = vpop.xlane.xlu0 %1048
    %1050 = vadd.xlane.f32.xlu0 %v993
    %v1051 = vpop.xlane.xlu0 %1050
    %1052 = vadd.xlane.f32.xlu0 %v994
    %v1053 = vpop.xlane.xlu0 %1052
    %1054 = vadd.xlane.f32.xlu0 %v995
    %v1055 = vpop.xlane.xlu0 %1054
    %1056 = vadd.xlane.f32.xlu0 %v996
    %v1057 = vpop.xlane.xlu0 %1056
    %1058 = vadd.xlane.f32.xlu0 %v997
    %v1059 = vpop.xlane.xlu0 %1058
    %1060 = vadd.xlane.f32.xlu0 %v998
    %v1061 = vpop.xlane.xlu0 %1060
    %1062 = vadd.xlane.f32.xlu0 %v999
    %v1063 = vpop.xlane.xlu0 %1062
    %v1064 = vsub.f32 %v808, %v1001
    %v1065 = vsub.f32 %v809, %v1003
    %v1066 = vsub.f32 %v810, %v1005
    %v1067 = vsub.f32 %v811, %v1007
    %v1068 = vsub.f32 %v812, %v1009
    %v1069 = vsub.f32 %v813, %v1011
    %v1070 = vsub.f32 %v814, %v1013
    %v1071 = vsub.f32 %v815, %v1015
    %v1072 = vsub.f32 %v816, %v1017
    %v1073 = vsub.f32 %v817, %v1019
    %v1074 = vsub.f32 %v818, %v1021
    %v1075 = vsub.f32 %v819, %v1023
    %v1076 = vsub.f32 %v820, %v1025
    %v1077 = vsub.f32 %v821, %v1027
    %v1078 = vsub.f32 %v822, %v1029
    %v1079 = vsub.f32 %v823, %v1031
    %v1080 = vsub.f32 %v824, %v1033
    %v1081 = vsub.f32 %v825, %v1035
    %v1082 = vsub.f32 %v826, %v1037
    %v1083 = vsub.f32 %v827, %v1039
    %v1084 = vsub.f32 %v828, %v1041
    %v1085 = vsub.f32 %v829, %v1043
    %v1086 = vsub.f32 %v830, %v1045
    %v1087 = vsub.f32 %v831, %v1047
    %v1088 = vsub.f32 %v832, %v1049
    %v1089 = vsub.f32 %v833, %v1051
    %v1090 = vsub.f32 %v834, %v1053
    %v1091 = vsub.f32 %v835, %v1055
    %v1092 = vsub.f32 %v836, %v1057
    %v1093 = vsub.f32 %v837, %v1059
    %v1094 = vsub.f32 %v838, %v1061
    %v1095 = vsub.f32 %v839, %v1063
    %vm1096 = vcmask 7168
    %1097 = vst.msk [vmem:[%s6] sm:$0xff] %vm1096, %v1064
    %1098 = vst.msk [vmem:[%s6 + $0x8] sm:$0xff] %vm1096, %v1065
    %1099 = vst.msk [vmem:[%s6 + $0x10] sm:$0xff] %vm1096, %v1066
    %1100 = vst.msk [vmem:[%s6 + $0x18] sm:$0xff] %vm1096, %v1067
    %1101 = vst.msk [vmem:[%s6 + $0x20] sm:$0xff] %vm1096, %v1068
    %1102 = vst.msk [vmem:[%s6 + $0x28] sm:$0xff] %vm1096, %v1069
    %1103 = vst.msk [vmem:[%s6 + $0x30] sm:$0xff] %vm1096, %v1070
    %1104 = vst.msk [vmem:[%s6 + $0x38] sm:$0xff] %vm1096, %v1071
    %1105 = vst.msk [vmem:[%s6 + $0x40] sm:$0xff] %vm1096, %v1072
    %1106 = vst.msk [vmem:[%s6 + $0x48] sm:$0xff] %vm1096, %v1073
    %1107 = vst.msk [vmem:[%s6 + $0x50] sm:$0xff] %vm1096, %v1074
    %1108 = vst.msk [vmem:[%s6 + $0x58] sm:$0xff] %vm1096, %v1075
    %1109 = vst.msk [vmem:[%s6 + $0x60] sm:$0xff] %vm1096, %v1076
    %1110 = vst.msk [vmem:[%s6 + $0x68] sm:$0xff] %vm1096, %v1077
    %1111 = vst.msk [vmem:[%s6 + $0x70] sm:$0xff] %vm1096, %v1078
    %1112 = vst.msk [vmem:[%s6 + $0x78] sm:$0xff] %vm1096, %v1079
    %1113 = vst.msk [vmem:[%s6 + $0x80] sm:$0xff] %vm1096, %v1080
    %1114 = vst.msk [vmem:[%s6 + $0x88] sm:$0xff] %vm1096, %v1081
    %1115 = vst.msk [vmem:[%s6 + $0x90] sm:$0xff] %vm1096, %v1082
    %1116 = vst.msk [vmem:[%s6 + $0x98] sm:$0xff] %vm1096, %v1083
    %1117 = vst.msk [vmem:[%s6 + $0xa0] sm:$0xff] %vm1096, %v1084
    %1118 = vst.msk [vmem:[%s6 + $0xa8] sm:$0xff] %vm1096, %v1085
    %1119 = vst.msk [vmem:[%s6 + $0xb0] sm:$0xff] %vm1096, %v1086
    %1120 = vst.msk [vmem:[%s6 + $0xb8] sm:$0xff] %vm1096, %v1087
    %1121 = vst.msk [vmem:[%s6 + $0xc0] sm:$0xff] %vm1096, %v1088
    %1122 = vst.msk [vmem:[%s6 + $0xc8] sm:$0xff] %vm1096, %v1089
    %1123 = vst.msk [vmem:[%s6 + $0xd0] sm:$0xff] %vm1096, %v1090
    %1124 = vst.msk [vmem:[%s6 + $0xd8] sm:$0xff] %vm1096, %v1091
    %1125 = vst.msk [vmem:[%s6 + $0xe0] sm:$0xff] %vm1096, %v1092
    %1126 = vst.msk [vmem:[%s6 + $0xe8] sm:$0xff] %vm1096, %v1093
    %1127 = vst.msk [vmem:[%s6 + $0xf0] sm:$0xff] %vm1096, %v1094
    %1128 = vst.msk [vmem:[%s6 + $0xf8] sm:$0xff] %vm1096, %v1095
    // Predicated region
    $region18: #{tpu_custom_call.1} parent=1 // pred_check
      _
    $region19: #{tpu_custom_call.1} parent=1 // pred_check_branch
      %1130 = sbr.rel (0) target = $region21
    $region20: #{tpu_custom_call.1} parent=1 // pred_region
      %1132 = vsyncadd [#allocation3], 0
      %s1133 = sshll.u32 [#allocation2], 4
      %s1134 = int_to_ptr.vmem [resolvable:$true] %s1133
      %s1135 = sshll.u32 %s4, 4
      %s1136 = int_to_ptr.hbm [resolvable:$true] %s1135
      %1141 = dma.vmem_to_hbm [thread:$0]  %s1134, 4096, %s1136, [#allocation3], 128, 128, 8
    $region21: #{tpu_custom_call.1} parent=1 // pred_fallthru
      _
    // Predicated region
    $region22: #{tpu_custom_call.1} parent=1 // pred_check
      _
    $region23: #{tpu_custom_call.1} parent=1 // pred_check_branch
      %1143 = sbr.rel (0) target = $region25
    $region24: #{tpu_custom_call.1} parent=1 // pred_region
      %1145 = vsyncadd [#allocation5], 0
      %s1146 = sshll.u32 [#allocation4], 4
      %s1147 = int_to_ptr.vmem [resolvable:$true] %s1146
      %s1148 = sshll.u32 %s5, 4
      %s1149 = int_to_ptr.hbm [resolvable:$true] %s1148
      %1154 = dma.vmem_to_hbm [thread:$0]  %s1147, 2048, %s1149, [#allocation5], 64, 64, 4
    $region25: #{tpu_custom_call.1} parent=1 // pred_fallthru
      _
    // Predicated region
    $region26: #{tpu_custom_call.1} parent=1 // pred_check
      _
    $region27: #{tpu_custom_call.1} parent=1 // pred_check_branch
      %1156 = sbr.rel (0) target = $region29
    $region28: #{tpu_custom_call.1} parent=1 // pred_region
      _
    $region29: #{tpu_custom_call.1} parent=1 // pred_fallthru
      _
    // Predicated region
    $region30: #{tpu_custom_call.1} parent=1 // pred_check
      _
    $region31: #{tpu_custom_call.1} parent=1 // pred_check_branch
      %1158 = sbr.rel (0) target = $region33
    $region32: #{tpu_custom_call.1} parent=1 // pred_region
      %1160 = dma.done [#allocation3], 4096
    $region33: #{tpu_custom_call.1} parent=1 // pred_fallthru
      _
    // Predicated region
    $region34: #{tpu_custom_call.1} parent=1 // pred_check
      _
    $region35: #{tpu_custom_call.1} parent=1 // pred_check_branch
      %1162 = sbr.rel (0) target = $region37
    $region36: #{tpu_custom_call.1} parent=1 // pred_region
      %1164 = dma.done [#allocation5], 2048
    $region37: #{tpu_custom_call.1} parent=1 // pred_fallthru
      _
    // Predicated region
    $region38: #{tpu_custom_call.1} parent=1 // pred_check
      _
    $region39: #{tpu_custom_call.1} parent=1 // pred_check_branch
      %1166 = sbr.rel (0) target = $region41
    $region40: #{tpu_custom_call.1} parent=1 // pred_region
      _
    $region41: #{tpu_custom_call.1} parent=1 // pred_fallthru
      _
    %1167 = vsyncpa [#allocation3], 1
    %1168 = vsyncpa [#allocation5], 1

</llo_original>
